<compile_context>
chip_gen: v7x
topology: tpu7x:2x2x1
jax: 0.10.0
libtpu: 0.0.40
codegen_flags: <defaults>
</compile_context>

<pallas_src>
import functools
from typing import Dict, List, Tuple

import jax
import jax.numpy as jnp
from jax.experimental import pallas as pl
from jax.experimental.pallas import tpu as pltpu


# ----------------------------------------------------------------------------
# Minimal transform "registry" (stands in for hannah's registry.transforms).
# Each entry maps a name to an elementwise op tag; args are baked in as
# compile-time constants, mirroring nn.Module attributes set in __init__.
# ----------------------------------------------------------------------------
_REGISTRY = {
    "gain": "mul",   # x -> x * factor
    "bias": "add",   # x -> x + offset
}
# TODO(synk): transforms in the real registry that need randomness / resampling
# (e.g. SpecAugment-style masking, time-stretch) are not representable as a
# static fused elementwise chain and are not implemented here.


def _augment_kernel(x_ref, o_ref, *, chain: Tuple[Tuple[str, float], ...]):
    """Fused elementwise augmentation chain, f32 compute in-register."""
    v = x_ref[...].astype(jnp.float32)
    for op, val in chain:
        if op == "mul":
            v = v * jnp.float32(val)
        elif op == "add":
            v = v + jnp.float32(val)
        else:
            raise ValueError(f"unknown op {op}")
    o_ref[...] = v.astype(o_ref.dtype)


def _pick_lane_width(n: int) -> int:
    """Widest lane-dense last dim (multiple of 128) that divides n, else 512."""
    for cand in (4096, 2048, 1024, 512, 256, 128):
        if n % cand == 0:
            return cand
    return 512  # requires a small tail pad


@functools.partial(jax.jit, static_argnames=("chain",))
def _apply_chain(x: jax.Array, chain: Tuple[Tuple[str, float], ...]) -> jax.Array:
    orig_shape = x.shape
    dtype = x.dtype
    n = x.size
    xf = x.reshape(-1)

    lane_w = _pick_lane_width(n)
    n_slab = pl.cdiv(n, lane_w) * lane_w
    if n_slab != n:
        # Rare path (element count not a multiple of 128): pad only enough to
        # reshape into a lane-dense 2D slab.  The common NCHW / aligned case
        # pays no pad copy at all.
        xf = jnp.pad(xf, (0, n_slab - n))
    rows = n_slab // lane_w
    x2d = xf.reshape(rows, lane_w)

    # Block sizing: ~2 MiB blocks.  Input + output, each double-buffered,
    # is ~8 MiB -> safely under v7x's 32 MiB default scoped VMEM (and trivially
    # under v5e/v6e's budget) while amortizing the ~0.35 us per-grid-step cost.
    target_block_bytes = 2 * 1024 * 1024
    elem_bytes = jnp.dtype(dtype).itemsize
    max_rows = max(8, (target_block_bytes // (lane_w * elem_bytes)) // 8 * 8)
    block_rows = rows if rows <= max_rows else max_rows
    grid = (pl.cdiv(rows, block_rows),)  # ragged last block masked by Pallas

    kernel = functools.partial(_augment_kernel, chain=chain)
    out2d = pl.pallas_call(
        kernel,
        out_shape=jax.ShapeDtypeStruct((rows, lane_w), dtype),
        grid_spec=pltpu.PrefetchScalarGridSpec(
            num_scalar_prefetch=0,
            grid=grid,
            in_specs=[pl.BlockSpec((block_rows, lane_w), lambda i: (i, 0))],
            out_specs=pl.BlockSpec((block_rows, lane_w), lambda i: (i, 0)),
        ),
        compiler_params=pltpu.CompilerParams(
            dimension_semantics=("parallel",),
        ),
    )(x2d)

    out = out2d.reshape(-1)
    if out.shape[0] != n:
        out = out[:n]
    return out.reshape(orig_shape)


class BatchAugmentationPipeline:
    """JAX/Pallas port of hannah BatchAugmentationPipeline."""

    def __init__(self, transforms: Dict[str, Dict[str, float]] = {}):
        chain: List[Tuple[str, float]] = []
        for name, args in transforms.items():
            if name not in _REGISTRY:
                raise KeyError(f"transform {name!r} not registered")
            op = _REGISTRY[name]
            # single scalar argument per transform ("factor" / "offset")
            (val,) = args.values()
            chain.append((op, float(val)))
        self.chain: Tuple[Tuple[str, float], ...] = tuple(chain)

    def __call__(self, x: jax.Array) -> jax.Array:
        if not self.chain:
            # default transforms={} -> identity, zero device work
            return x
        return _apply_chain(x, self.chain)


def _reference(x, chain):
    v = x.astype(jnp.float32)
    for op, val in chain:
        v = v * val if op == "mul" else v + val
    return v.astype(x.dtype)


if __name__ == "__main__":
    key = jax.random.PRNGKey(0)
    x = jax.random.normal(key, (2, 4, 16, 16), dtype=jnp.float32)  # NCHW

    # Case 1: default empty transforms -> identity (matches PyTorch default).
    pipe_id = BatchAugmentationPipeline({})
    y_id = jax.block_until_ready(pipe_id(x))
    assert y_id.shape == x.shape and y_id.dtype == x.dtype
    assert jnp.allclose(y_id, x, atol=0.0)

    # Case 2: configured pipeline (gain then bias), fused in one kernel.
    cfg = {"gain": {"factor": 0.5}, "bias": {"offset": 0.1}}
    pipe = BatchAugmentationPipeline(cfg)
    y = jax.block_until_ready(pipe(x))
    y_ref = _reference(x, pipe.chain)
    assert y.shape == x.shape and y.dtype == x.dtype
    assert jnp.allclose(y, y_ref, atol=1e-6)

    # Case 3: native bf16 I/O + non-128-aligned element count (pad/tail path).
    xb = jax.random.normal(jax.random.PRNGKey(1), (2, 3, 5, 7),
                           dtype=jnp.bfloat16)
    yb = jax.block_until_ready(pipe(xb))
    yb_ref = _reference(xb, pipe.chain)
    assert yb.shape == xb.shape and yb.dtype == xb.dtype
    assert jnp.allclose(yb.astype(jnp.float32), yb_ref.astype(jnp.float32),
                        atol=1e-2)

    print("KERNEL_OK")
</pallas_src>

<mosaic_0001>
module attributes {stable_mosaic.version = 11 : i64} {
  func.func @_augment_kernel(%arg0: i32, %arg1: memref<1x2048xf32, #tpu.memory_space<vmem>>, %arg2: memref<1x2048xf32, #tpu.memory_space<vmem>>) attributes {dimension_semantics = [#tpu.dimension_semantics<parallel>], iteration_bounds = array<i64: 1>, scalar_prefetch = 0 : i64, scratch_operands = 0 : i64, tpu.core_type = #tpu.core_type<tc>, window_params = [{transform_indices = @transform_0, window_bounds = array<i64: 1, 2048>}, {transform_indices = @transform_1, window_bounds = array<i64: 1, 2048>}]} {
    %c0 = arith.constant 0 : index
    %c0_0 = arith.constant 0 : index
    %0 = vector.load %arg1[%c0, %c0_0] : memref<1x2048xf32, #tpu.memory_space<vmem>>, vector<1x2048xf32>
    %cst = arith.constant 5.000000e-01 : f32
    %1 = vector.broadcast %cst : f32 to vector<1x2048xf32>
    %2 = arith.mulf %0, %1 : vector<1x2048xf32>
    %cst_1 = arith.constant 1.000000e-01 : f32
    %3 = vector.broadcast %cst_1 : f32 to vector<1x2048xf32>
    %4 = arith.addf %2, %3 : vector<1x2048xf32>
    %c0_2 = arith.constant 0 : index
    %c0_3 = arith.constant 0 : index
    %5 = vector.load %arg2[%c0_2, %c0_3] : memref<1x2048xf32, #tpu.memory_space<vmem>>, vector<1x2048xf32>
    tpu.vector_store %arg2[%c0_2, %c0_3], %4 {strides = array<i32>} : memref<1x2048xf32, #tpu.memory_space<vmem>>, vector<1x2048xf32>,
    return
  }
  func.func @transform_0(%arg0: i32) -> (i32, i32) {
    %c0_i32 = arith.constant 0 : i32
    %c0_i32_0 = arith.constant 0 : i32
    return %arg0, %c0_i32 : i32, i32
  }
  func.func @transform_1(%arg0: i32) -> (i32, i32) {
    %c0_i32 = arith.constant 0 : i32
    %c0_i32_0 = arith.constant 0 : i32
    return %arg0, %c0_i32 : i32, i32
  }
}

</mosaic_0001>

<llo_original>
// kernel: _apply_chain.1
$region0: #{_apply_chain.1}
  #allocation0 [shape = 'u32[]', space=smem, size = 0x4, offset = 0x4, fixed_abs, tag = 'smem constant byte address 0x4 - core index']
  #allocation1 [shape = 'u32[144,128]{1,0:T(1,128)}', space=vmem, size = 0x12000, scoped, tag = 'internal scratch']
  %s0 = inlined_call_operand.vmem [shape: f32[1,2048], index: 0, kind: input, shape index: {}]
  %s1 = inlined_call_operand.vmem [shape: f32[1,2048], index: 1, kind: output, shape index: {}]
  %s2 = sld [smem:[#allocation0]]
  $region14: #{_apply_chain.1} parent=0
    _
  %s4 = ssub.s32 1, %s2
  %s5 = scalar_select 0, %s4, %s2
  // Predicated region
  $region2: #{_apply_chain.1} parent=0 // pred_check
    _
  $region3: #{_apply_chain.1} parent=0 // pred_check_branch
    %7 = sbr.rel (0) target = $region5
  $region4: #{_apply_chain.1} parent=0 // pred_region
    _
  $region5: #{_apply_chain.1} parent=0 // pred_fallthru
    _
  %v8 = vld [vmem:[%s0] sm:$0xff]
  %v9 = vld [vmem:[%s0 + $0x8] sm:$0xff]
  %v10 = vmul.f32 %v8, 0.5
  %v11 = vmul.f32 %v9, 0.5
  %v12 = vadd.f32 %v10, 0.1
  %v13 = vadd.f32 %v11, 0.1
  %14 = vst [vmem:[%s1] sm:$0xff] %v12
  %15 = vst [vmem:[%s1 + $0x8] sm:$0xff] %v13
  // Predicated region
  $region6: #{_apply_chain.1} parent=0 // pred_check
    _
  $region7: #{_apply_chain.1} parent=0 // pred_check_branch
    %17 = sbr.rel (0) target = $region9
  $region8: #{_apply_chain.1} parent=0 // pred_region
    _
  $region9: #{_apply_chain.1} parent=0 // pred_fallthru
    _
  // Predicated region
  $region10: #{_apply_chain.1} parent=0 // pred_check
    _
  $region11: #{_apply_chain.1} parent=0 // pred_check_branch
    %19 = sbr.rel (0) target = $region13
  $region12: #{_apply_chain.1} parent=0 // pred_region
    _
  $region13: #{_apply_chain.1} parent=0 // pred_fallthru
    _

</llo_original>
